<compile_context>
chip_gen: v7x
topology: tpu7x:2x2x1
jax: 0.10.0
libtpu: 0.0.40
codegen_flags: <defaults>
</compile_context>

<pallas_src>
import math
import functools

import jax
import jax.numpy as jnp
from jax import lax
from jax.experimental import pallas as pl
from jax.experimental.pallas import tpu as pltpu


_INV_SQRT2 = 1.0 / math.sqrt(2.0)


def _gelu_exact(x):
    # PyTorch nn.GELU() default: exact erf formulation, computed in f32.
    # (jax.nn.gelu(approximate=True) would push the activation to the EUP's
    #  free slot; kept exact for numerical parity with the module.)
    return 0.5 * x * (1.0 + lax.erf(x * _INV_SQRT2))


def _round_up(n, m):
    return ((n + m - 1) // m) * m


def _vmem_capacity_bytes():
    try:
        return int(pltpu.get_tpu_info().vmem_capacity_bytes)
    except Exception:
        return 64 * 1024 * 1024          # conservative fallback (v7x per-core)


def _tensorcores_per_chip():
    # v7x has 2 TensorCores per chip; v5e/v6e have 1.
    try:
        kind = jax.devices()[0].device_kind.lower()
        if "v7" in kind or "7x" in kind:
            return 2
    except Exception:
        pass
    return 1


def _row_align(dtype):
    # Sublane packing: 8 rows/vreg for 4-byte, 16 for 2-byte, 32 for 1-byte.
    bpe = jnp.dtype(dtype).itemsize
    return 8 * max(1, 4 // bpe)


def _pick_tile_h(h_padded, tile_h_req):
    # Largest multiple of 128 that divides the 128-padded H and is <= request.
    k = h_padded // 128
    dmax = max(1, min(k, tile_h_req // 128))
    d = max(i for i in range(1, dmax + 1) if k % i == 0)
    return 128 * d


def _vmem_footprint(tile_m, tile_h, d_in_p, d_out_p, x_bpe, w_bpe):
    # Double-buffered input/output blocks + resident f32 accumulator.
    est = 2 * (tile_m * d_in_p * x_bpe        # x block
               + d_in_p * tile_h * w_bpe      # w1 block
               + 8 * tile_h * w_bpe           # b1 block (pads to 8 sublanes)
               + tile_h * d_out_p * w_bpe     # w2 block
               + 8 * d_out_p * w_bpe          # b2 block
               + tile_m * d_out_p * x_bpe)    # out block
    est += 4 * tile_m * d_out_p               # f32 accumulator scratch
    return est


def _ffn_kernel(x_ref, w1_ref, b1_ref, w2_ref, b2_ref, o_ref, acc_ref):
    h_idx = pl.program_id(1)

    @pl.when(h_idx == 0)
    def _init():
        acc_ref[...] = jnp.zeros_like(acc_ref)

    # Linear 1 on one H-column block; operands stay in their native dtype
    # (bf16 runs the MXU at full rate; f32 inputs take the slower multi-pass
    # MXU path -- cast inputs to bf16 at the call site if numerics allow).
    h = jnp.dot(x_ref[...], w1_ref[...], preferred_element_type=jnp.float32)
    h = _gelu_exact(h + b1_ref[...].astype(jnp.float32))   # dropout = identity (eval)

    # Linear 2: accumulate this H-block's contribution in f32.
    acc_ref[...] += jnp.dot(h.astype(w2_ref.dtype), w2_ref[...],
                            preferred_element_type=jnp.float32)

    @pl.when(h_idx == pl.num_programs(1) - 1)
    def _finalize():
        # The PyTorch module applies GELU after l_2 as well.
        y = _gelu_exact(acc_ref[...] + b2_ref[...].astype(jnp.float32))
        o_ref[...] = y.astype(o_ref.dtype)                 # dropout = identity (eval)
    # TODO(synk): training-mode dropout omitted (inference path); would need
    # pltpu.prng_seed + pltpu.prng_random_bits for a stochastic mask.


@functools.partial(
    jax.jit,
    static_argnames=("tile_m", "tile_h", "d_out", "vmem_limit",
                     "flops", "transcendentals", "bytes_accessed"))
def _ffn_call(x, w1_p, b1_p, w2_p, b2_p, *, tile_m, tile_h, d_out, vmem_limit,
              flops, transcendentals, bytes_accessed):
    B, d_in = x.shape
    d_in_p, H_p = w1_p.shape
    d_out_p = w2_p.shape[1]
    B_p = _round_up(B, tile_m)

    # Zero padding is exact: padded x cols meet zero w1 rows; padded H cols
    # give GELU(0)=0 feeding zero w2 rows; padded output cols are sliced off.
    x_p = jnp.pad(x, ((0, B_p - B), (0, d_in_p - d_in)))

    grid = (B_p // tile_m, H_p // tile_h)     # reduction (H) axis last

    out_p = pl.pallas_call(
        _ffn_kernel,
        out_shape=jax.ShapeDtypeStruct((B_p, d_out_p), x.dtype),
        grid_spec=pltpu.PrefetchScalarGridSpec(
            num_scalar_prefetch=0,
            grid=grid,
            in_specs=[
                pl.BlockSpec((tile_m, d_in_p), lambda i, h: (i, 0)),    # x rows
                pl.BlockSpec((d_in_p, tile_h), lambda i, h: (0, h)),    # w1 cols
                pl.BlockSpec((1, tile_h), lambda i, h: (0, h)),         # b1
                pl.BlockSpec((tile_h, d_out_p), lambda i, h: (h, 0)),   # w2 rows
                pl.BlockSpec((1, d_out_p), lambda i, h: (0, 0)),        # b2
            ],
            out_specs=pl.BlockSpec((tile_m, d_out_p), lambda i, h: (i, 0)),
            scratch_shapes=[pltpu.VMEM((tile_m, d_out_p), jnp.float32)],
        ),
        compiler_params=pltpu.CompilerParams(
            dimension_semantics=("parallel", "arbitrary"),
            vmem_limit_bytes=vmem_limit,
        ),
        cost_estimate=pl.CostEstimate(
            flops=flops, transcendentals=transcendentals,
            bytes_accessed=bytes_accessed),
    )(x_p, w1_p, b1_p, w2_p, b2_p)

    return out_p[:B, :d_out]


def pad_ffn_params(w1, b1, w2, b2, *, tile_h=1024):
    """Pad weights once (call outside the per-step hot path and reuse)."""
    d_in, H = w1.shape
    d_out = w2.shape[1]
    d_in_p = _round_up(d_in, 128)
    d_out_p = _round_up(d_out, 128)
    H_p = _round_up(H, 128)                  # pad H to 128, NOT to tile_h
    tile_h = _pick_tile_h(H_p, max(128, tile_h))

    w1_p = jnp.pad(w1, ((0, d_in_p - d_in), (0, H_p - H)))
    b1_p = jnp.pad(b1, (0, H_p - H)).reshape(1, H_p)
    w2_p = jnp.pad(w2, ((0, H_p - H), (0, d_out_p - d_out)))
    b2_p = jnp.pad(b2, (0, d_out_p - d_out)).reshape(1, d_out_p)

    meta = {"d_in": d_in, "H": H, "d_out": d_out, "tile_h": tile_h}
    return (w1_p, b1_p, w2_p, b2_p), meta


def ffn_forward_padded(x, padded_params, meta, *, tile_m=512):
    w1_p, b1_p, w2_p, b2_p = padded_params
    d_out, tile_h = meta["d_out"], meta["tile_h"]
    d_in_p, H_p = w1_p.shape
    d_out_p = w2_p.shape[1]
    B = x.shape[0]

    x_bpe = jnp.dtype(x.dtype).itemsize
    w_bpe = jnp.dtype(w1_p.dtype).itemsize
    row_align = _row_align(x.dtype)

    # Row tile: large (sets arithmetic intensity; weights re-stream from HBM
    # once per row tile), aligned to the dtype's sublane pack.
    tile_m = max(row_align, _round_up(min(tile_m, max(B, 1)), row_align))

    # v7x megacore: if there would be a single row tile and the batch can be
    # split, halve the row tile so both TensorCores get work.
    if (_tensorcores_per_chip() >= 2
            and _round_up(B, row_align) <= tile_m
            and tile_m >= 2 * row_align):
        tile_m = _round_up(tile_m // 2, row_align)

    # Fit the double-buffered working set in the chip's real VMEM
    # (v5e/v6e: 128 MiB, v7x: 64 MiB) with headroom; shrink tile_h first
    # (more reduction steps), then tile_m.
    capacity = _vmem_capacity_bytes()
    budget = int(0.85 * capacity)

    def _fits(tm, th):
        return _vmem_footprint(tm, th, d_in_p, d_out_p, x_bpe, w_bpe) <= budget

    while not _fits(tile_m, tile_h) and tile_h > 128:
        tile_h = _pick_tile_h(H_p, tile_h - 128)
    while not _fits(tile_m, tile_h) and tile_m > row_align:
        tile_m = max(row_align, _round_up(tile_m // 2, row_align))
    # TODO(synk): for very large d_out on v7x a d_out grid axis would bound the
    # accumulator/output tile further; not needed at these sizes.

    need = _vmem_footprint(tile_m, tile_h, d_in_p, d_out_p, x_bpe, w_bpe)
    vmem_limit = int(min(budget, max(32 * 1024 * 1024, int(1.25 * need), need)))

    B_p = _round_up(B, tile_m)
    n_row_tiles = B_p // tile_m
    flops = 2 * B_p * H_p * (d_in_p + d_out_p)
    transcendentals = B_p * (H_p + d_out_p)      # one erf per hidden/output elem
    w_bytes = w_bpe * (d_in_p * H_p + H_p * d_out_p + H_p + d_out_p)
    bytes_accessed = x_bpe * B_p * (d_in_p + d_out_p) + n_row_tiles * w_bytes

    return _ffn_call(x, w1_p, b1_p, w2_p, b2_p,
                     tile_m=tile_m, tile_h=tile_h, d_out=d_out,
                     vmem_limit=vmem_limit, flops=flops,
                     transcendentals=transcendentals,
                     bytes_accessed=bytes_accessed)


def ffn_forward(x, w1, b1, w2, b2, *, tile_m=512, tile_h=1024):
    """One-shot convenience API. For repeated calls, pad once with
    pad_ffn_params and call ffn_forward_padded."""
    padded, meta = pad_ffn_params(w1, b1, w2, b2, tile_h=tile_h)
    return ffn_forward_padded(x, padded, meta, tile_m=tile_m)


def _init_linear(key, fan_in, fan_out):
    # Deterministic PyTorch-style init: kaiming-uniform weight, uniform bias.
    kw, kb = jax.random.split(key)
    bound_w = math.sqrt(3.0 / fan_in)            # kaiming_uniform(a=sqrt(5))
    w = jax.random.uniform(kw, (fan_in, fan_out), jnp.float32, -bound_w, bound_w)
    bound_b = 1.0 / math.sqrt(fan_in)
    b = jax.random.uniform(kb, (fan_out,), jnp.float32, -bound_b, bound_b)
    return w, b


if __name__ == "__main__":
    key = jax.random.PRNGKey(0)
    k_x, k_l1, k_l2 = jax.random.split(key, 3)

    batch, input_dim, hidden_dim, output_dim = 16, 16, 32, 16

    x = jax.random.normal(k_x, (batch, input_dim), dtype=jnp.float32)
    w1, b1 = _init_linear(k_l1, input_dim, hidden_dim)
    w2, b2 = _init_linear(k_l2, hidden_dim, output_dim)

    # f32 path (one-shot API).
    out = jax.block_until_ready(ffn_forward(x, w1, b1, w2, b2))
    assert out.shape == (batch, output_dim)

    ref = _gelu_exact(x @ w1 + b1)
    ref = _gelu_exact(ref @ w2 + b2)
    assert jnp.allclose(out, ref, atol=1e-5, rtol=1e-5), "f32 mismatch vs reference"

    # bf16 fast path via the pad-once API (native MXU inputs, f32 accumulation).
    bf = jnp.bfloat16
    padded, meta = pad_ffn_params(w1.astype(bf), b1.astype(bf),
                                  w2.astype(bf), b2.astype(bf))
    out_bf = jax.block_until_ready(ffn_forward_padded(x.astype(bf), padded, meta))
    # Mirror the kernel's rounding points for the bf16 reference.
    xb, w1b, b1b = (a.astype(bf).astype(jnp.float32) for a in (x, w1, b1))
    w2b, b2b = (a.astype(bf).astype(jnp.float32) for a in (w2, b2))
    h_ref = _gelu_exact(xb @ w1b + b1b).astype(bf).astype(jnp.float32)
    ref_bf = _gelu_exact(h_ref @ w2b + b2b).astype(bf).astype(jnp.float32)
    assert jnp.allclose(out_bf.astype(jnp.float32), ref_bf, atol=5e-2, rtol=5e-2), \
        "bf16 mismatch vs reference"

    print("KERNEL_OK")
</pallas_src>

<mosaic_0001>
module attributes {stable_mosaic.version = 11 : i64} {
  func.func @_ffn_kernel(%arg0: i32, %arg1: i32, %arg2: memref<16x128xf32, #tpu.memory_space<vmem>>, %arg3: memref<128x128xf32, #tpu.memory_space<vmem>>, %arg4: memref<1x128xf32, #tpu.memory_space<vmem>>, %arg5: memref<128x128xf32, #tpu.memory_space<vmem>>, %arg6: memref<1x128xf32, #tpu.memory_space<vmem>>, %arg7: memref<16x128xf32, #tpu.memory_space<vmem>>, %arg8: memref<16x128xf32, #tpu.memory_space<vmem>>) attributes {dimension_semantics = [#tpu.dimension_semantics<parallel>, #tpu.dimension_semantics<arbitrary>], iteration_bounds = array<i64: 1, 1>, scalar_prefetch = 0 : i64, scratch_operands = 1 : i64, tpu.core_type = #tpu.core_type<tc>, window_params = [{transform_indices = @transform_0, window_bounds = array<i64: 16, 128>}, {transform_indices = @transform_1, window_bounds = array<i64: 128, 128>}, {transform_indices = @transform_2, window_bounds = array<i64: 1, 128>}, {transform_indices = @transform_3, window_bounds = array<i64: 128, 128>}, {pipeline_mode = #tpu.pipeline_mode<synchronous>, transform_indices = @transform_4, window_bounds = array<i64: 1, 128>}, {transform_indices = @transform_5, window_bounds = array<i64: 16, 128>}]} {
    %c0_i32 = arith.constant 0 : i32
    %0 = arith.cmpi eq, %arg1, %c0_i32 : i32
    %1 = arith.extui %0 : i1 to i32
    %c0_i32_0 = arith.constant 0 : i32
    %2 = arith.cmpi ne, %1, %c0_i32_0 : i32
    scf.if %2 {
      %cst_18 = arith.constant 0.000000e+00 : f32
      %25 = vector.broadcast %cst_18 : f32 to vector<16x128xf32>
      %c0_19 = arith.constant 0 : index
      %c0_20 = arith.constant 0 : index
      %26 = vector.load %arg8[%c0_19, %c0_20] : memref<16x128xf32, #tpu.memory_space<vmem>>, vector<16x128xf32>
      tpu.vector_store %arg8[%c0_19, %c0_20], %25 {strides = array<i32>} : memref<16x128xf32, #tpu.memory_space<vmem>>, vector<16x128xf32>,
    } else {
    }
    %c0 = arith.constant 0 : index
    %c0_1 = arith.constant 0 : index
    %3 = vector.load %arg2[%c0, %c0_1] : memref<16x128xf32, #tpu.memory_space<vmem>>, vector<16x128xf32>
    %c0_2 = arith.constant 0 : index
    %c0_3 = arith.constant 0 : index
    %4 = vector.load %arg3[%c0_2, %c0_3] : memref<128x128xf32, #tpu.memory_space<vmem>>, vector<128x128xf32>
    %cst = arith.constant dense<0.000000e+00> : vector<16x128xf32>
    %5 = tpu.matmul %3, %4, %cst {dimension_numbers = #tpu.dot_dimension_numbers<[1], [0], [0], [1], [0, 0, 1, 1], [], []>} : vector<16x128xf32>, vector<128x128xf32>, vector<16x128xf32> -> vector<16x128xf32>
    %c0_4 = arith.constant 0 : index
    %c0_5 = arith.constant 0 : index
    %6 = vector.load %arg4[%c0_4, %c0_5] : memref<1x128xf32, #tpu.memory_space<vmem>>, vector<1x128xf32>
    %7 = vector.broadcast %6 : vector<1x128xf32> to vector<16x128xf32>
    %8 = arith.addf %5, %7 : vector<16x128xf32>
    %cst_6 = arith.constant 5.000000e-01 : f32
    %9 = vector.broadcast %cst_6 : f32 to vector<16x128xf32>
    %10 = arith.mulf %9, %8 : vector<16x128xf32>
    %cst_7 = arith.constant 0.707106769 : f32
    %11 = vector.broadcast %cst_7 : f32 to vector<16x128xf32>
    %12 = arith.mulf %8, %11 : vector<16x128xf32>
    %13 = math.erf %12 : vector<16x128xf32>
    %cst_8 = arith.constant 1.000000e+00 : f32
    %14 = vector.broadcast %cst_8 : f32 to vector<16x128xf32>
    %15 = arith.addf %14, %13 : vector<16x128xf32>
    %16 = arith.mulf %10, %15 : vector<16x128xf32>
    %c0_9 = arith.constant 0 : index
    %c0_10 = arith.constant 0 : index
    %17 = vector.load %arg8[%c0_9, %c0_10] : memref<16x128xf32, #tpu.memory_space<vmem>>, vector<16x128xf32>
    %c0_11 = arith.constant 0 : index
    %c0_12 = arith.constant 0 : index
    %18 = vector.load %arg5[%c0_11, %c0_12] : memref<128x128xf32, #tpu.memory_space<vmem>>, vector<128x128xf32>
    %cst_13 = arith.constant dense<0.000000e+00> : vector<16x128xf32>
    %19 = tpu.matmul %16, %18, %cst_13 {dimension_numbers = #tpu.dot_dimension_numbers<[1], [0], [0], [1], [0, 0, 1, 1], [], []>} : vector<16x128xf32>, vector<128x128xf32>, vector<16x128xf32> -> vector<16x128xf32>
    %20 = arith.addf %17, %19 : vector<16x128xf32>
    %c0_14 = arith.constant 0 : index
    %c0_15 = arith.constant 0 : index
    %21 = vector.load %arg8[%c0_14, %c0_15] : memref<16x128xf32, #tpu.memory_space<vmem>>, vector<16x128xf32>
    tpu.vector_store %arg8[%c0_14, %c0_15], %20 {strides = array<i32>} : memref<16x128xf32, #tpu.memory_space<vmem>>, vector<16x128xf32>,
    %c0_i32_16 = arith.constant 0 : i32
    %22 = arith.cmpi eq, %arg1, %c0_i32_16 : i32
    %23 = arith.extui %22 : i1 to i32
    %c0_i32_17 = arith.constant 0 : i32
    %24 = arith.cmpi ne, %23, %c0_i32_17 : i32
    scf.if %24 {
      %c0_18 = arith.constant 0 : index
      %c0_19 = arith.constant 0 : index
      %25 = vector.load %arg8[%c0_18, %c0_19] : memref<16x128xf32, #tpu.memory_space<vmem>>, vector<16x128xf32>
      %c0_20 = arith.constant 0 : index
      %c0_21 = arith.constant 0 : index
      %26 = vector.load %arg6[%c0_20, %c0_21] : memref<1x128xf32, #tpu.memory_space<vmem>>, vector<1x128xf32>
      %27 = vector.broadcast %26 : vector<1x128xf32> to vector<16x128xf32>
      %28 = arith.addf %25, %27 : vector<16x128xf32>
      %cst_22 = arith.constant 5.000000e-01 : f32
      %29 = vector.broadcast %cst_22 : f32 to vector<16x128xf32>
      %30 = arith.mulf %29, %28 : vector<16x128xf32>
      %cst_23 = arith.constant 0.707106769 : f32
      %31 = vector.broadcast %cst_23 : f32 to vector<16x128xf32>
      %32 = arith.mulf %28, %31 : vector<16x128xf32>
      %33 = math.erf %32 : vector<16x128xf32>
      %cst_24 = arith.constant 1.000000e+00 : f32
      %34 = vector.broadcast %cst_24 : f32 to vector<16x128xf32>
      %35 = arith.addf %34, %33 : vector<16x128xf32>
      %36 = arith.mulf %30, %35 : vector<16x128xf32>
      %c0_25 = arith.constant 0 : index
      %c0_26 = arith.constant 0 : index
      %37 = vector.load %arg7[%c0_25, %c0_26] : memref<16x128xf32, #tpu.memory_space<vmem>>, vector<16x128xf32>
      tpu.vector_store %arg7[%c0_25, %c0_26], %36 {strides = array<i32>} : memref<16x128xf32, #tpu.memory_space<vmem>>, vector<16x128xf32>,
    } else {
    }
    return
  }
  func.func @transform_0(%arg0: i32, %arg1: i32) -> (i32, i32) {
    %c0_i32 = arith.constant 0 : i32
    %c0_i32_0 = arith.constant 0 : i32
    return %arg0, %c0_i32 : i32, i32
  }
  func.func @transform_1(%arg0: i32, %arg1: i32) -> (i32, i32) {
    %c0_i32 = arith.constant 0 : i32
    %c0_i32_0 = arith.constant 0 : i32
    return %c0_i32, %arg1 : i32, i32
  }
  func.func @transform_2(%arg0: i32, %arg1: i32) -> (i32, i32) {
    %c0_i32 = arith.constant 0 : i32
    %c0_i32_0 = arith.constant 0 : i32
    return %c0_i32, %arg1 : i32, i32
  }
  func.func @transform_3(%arg0: i32, %arg1: i32) -> (i32, i32) {
    %c0_i32 = arith.constant 0 : i32
    %c0_i32_0 = arith.constant 0 : i32
    return %arg1, %c0_i32 : i32, i32
  }
  func.func @transform_4(%arg0: i32, %arg1: i32) -> (i32, i32) {
    %c0_i32 = arith.constant 0 : i32
    %c0_i32_0 = arith.constant 0 : i32
    %c0_i32_1 = arith.constant 0 : i32
    return %c0_i32, %c0_i32_0 : i32, i32
  }
  func.func @transform_5(%arg0: i32, %arg1: i32) -> (i32, i32) {
    %c0_i32 = arith.constant 0 : i32
    %c0_i32_0 = arith.constant 0 : i32
    return %arg0, %c0_i32 : i32, i32
  }
}

</mosaic_0001>

<llo_original>
// kernel: _ffn_call.1
$region0: #{_ffn_call.1}
  #allocation0 [shape = 'u32[]', space=smem, size = 0x4, offset = 0x4, fixed_abs, tag = 'smem constant byte address 0x4 - core index']
  #allocation1 [shape = 'u32[144,128]{1,0:T(1,128)}', space=vmem, size = 0x12000, scoped, tag = 'internal scratch']
  #allocation2 [shape = 'f32[16,128]{1,0:T(8,128)}', space=vmem, size = 0x2000, scoped, tag = 'scratch operand']
  %s0 = inlined_call_operand.vmem [shape: f32[16,128], index: 0, kind: input, shape index: {}]
  %s1 = inlined_call_operand.hbm [shape: f32[128,128], index: 1, kind: input, shape index: {}]
  %s2 = inlined_call_operand.vmem [shape: f32[1,128], index: 2, kind: input, shape index: {}]
  %s3 = inlined_call_operand.hbm [shape: f32[128,128], index: 3, kind: input, shape index: {}]
  %s4 = inlined_call_operand.vmem [shape: f32[1,128], index: 4, kind: input, shape index: {}]
  %s5 = inlined_call_operand.hbm [shape: f32[16,128], index: 5, kind: output, shape index: {}]
  %s6 = sld [smem:[#allocation0]]
  $region46: #{_ffn_call.1} parent=0
    _
  %s8 = ssub.s32 1, %s6
  %s9 = scalar_select 0, %s8, %s6
  $region1: #{_ffn_call.1} parent=0
    #allocation3 [shape = 'u8[65536]{0}', space=vmem, size = 0x10000, scoped, tag = 'input window, operand 1, single buffered']
    #allocation4 [shape = 's32[1]{0}', space=sflag, size = 0x4, scoped, tag = 'scoped memory for _ffn_call.1']
    #allocation5 [shape = 's32[1]{0}', space=sflag, size = 0x4, scoped, tag = 'scoped memory for _ffn_call.1']
    #allocation6 [shape = 'u8[65536]{0}', space=vmem, size = 0x10000, scoped, tag = 'input window, operand 3, single buffered']
    #allocation7 [shape = 's32[1]{0}', space=sflag, size = 0x4, scoped, tag = 'scoped memory for _ffn_call.1']
    #allocation8 [shape = 'u8[8192]{0}', space=vmem, size = 0x2000, scoped, tag = 'output window, operand 0, single buffered']
    %10 = vsyncpa [#allocation4], 0
    %11 = vsyncpa [#allocation7], 0
    %12 = vsyncpa [#allocation5], 0
    // Predicated region
    $region2: #{_ffn_call.1} parent=1 // pred_check
      _
    $region3: #{_ffn_call.1} parent=1 // pred_check_branch
      %14 = sbr.rel (0) target = $region5
    $region4: #{_ffn_call.1} parent=1 // pred_region
      _
    $region5: #{_ffn_call.1} parent=1 // pred_fallthru
      _
    // Predicated region
    $region6: #{_ffn_call.1} parent=1 // pred_check
      _
    $region7: #{_ffn_call.1} parent=1 // pred_check_branch
      %16 = sbr.rel (0) target = $region9
    $region8: #{_ffn_call.1} parent=1 // pred_region
      %s18 = ssub.s32 2048, 2048
      %19 = vsyncadd [#allocation4], %s18
      %s20 = sshll.u32 [#allocation3], 4
      %s21 = int_to_ptr.vmem [resolvable:$true] %s20
      %26 = dma.hbm_to_vmem [thread:$0]  %s1, 2048, %s21, [#allocation4], 128, 128, 8
    $region9: #{_ffn_call.1} parent=1 // pred_fallthru
      _
    // Predicated region
    $region10: #{_ffn_call.1} parent=1 // pred_check
      _
    $region11: #{_ffn_call.1} parent=1 // pred_check_branch
      %28 = sbr.rel (0) target = $region13
    $region12: #{_ffn_call.1} parent=1 // pred_region
      _
    $region13: #{_ffn_call.1} parent=1 // pred_fallthru
      _
    // Predicated region
    $region14: #{_ffn_call.1} parent=1 // pred_check
      _
    $region15: #{_ffn_call.1} parent=1 // pred_check_branch
      %30 = sbr.rel (0) target = $region17
    $region16: #{_ffn_call.1} parent=1 // pred_region
      %s32 = ssub.s32 2048, 2048
      %33 = vsyncadd [#allocation7], %s32
      %s34 = sshll.u32 [#allocation6], 4
      %s35 = int_to_ptr.vmem [resolvable:$true] %s34
      %40 = dma.hbm_to_vmem [thread:$0]  %s3, 2048, %s35, [#allocation7], 128, 128, 8
    $region17: #{_ffn_call.1} parent=1 // pred_fallthru
      _
    // Predicated region
    $region18: #{_ffn_call.1} parent=1 // pred_check
      _
    $region19: #{_ffn_call.1} parent=1 // pred_check_branch
      %42 = sbr.rel (0) target = $region21
    $region20: #{_ffn_call.1} parent=1 // pred_region
      _
    $region21: #{_ffn_call.1} parent=1 // pred_fallthru
      _
    // Predicated region
    $region22: #{_ffn_call.1} parent=1 // pred_check
      _
    $region23: #{_ffn_call.1} parent=1 // pred_check_branch
      %44 = sbr.rel (0) target = $region25
    $region24: #{_ffn_call.1} parent=1 // pred_region
      %45 = dma.done [#allocation4], 2048
    $region25: #{_ffn_call.1} parent=1 // pred_fallthru
      _
    // Predicated region
    $region26: #{_ffn_call.1} parent=1 // pred_check
      _
    $region27: #{_ffn_call.1} parent=1 // pred_check_branch
      %47 = sbr.rel (0) target = $region29
    $region28: #{_ffn_call.1} parent=1 // pred_region
      %48 = dma.done [#allocation7], 2048
    $region29: #{_ffn_call.1} parent=1 // pred_fallthru
      _
    %p49 = scmp.eq.s32.totalorder 0, 0
    // Predicated region
    $region30: #{_ffn_call.1} parent=1 // pred_check
      %p50 = pneg %p49
    $region31: #{_ffn_call.1} parent=1 // pred_check_branch
      %52 = sbr.rel (%p50) target = $region33
    $region32: #{_ffn_call.1} parent=1 // pred_region
      %53 = vst [vmem:[#allocation2] sm:$0xff] 0.0
      %54 = vst [vmem:[#allocation2 + $0x8] sm:$0xff] 0.0
    $region33: #{_ffn_call.1} parent=1 // pred_fallthru
      _
    %v55 = vld [vmem:[%s0] sm:$0xff]
    %v56 = vld [vmem:[%s0 + $0x8] sm:$0xff]
    %v57 = vld [vmem:[#allocation3] sm:$0xff]
    %v58 = vld [vmem:[#allocation3 + $0x8] sm:$0xff]
    %v59 = vld [vmem:[#allocation3 + $0x10] sm:$0xff]
    %v60 = vld [vmem:[#allocation3 + $0x18] sm:$0xff]
    %v61 = vld [vmem:[#allocation3 + $0x20] sm:$0xff]
    %v62 = vld [vmem:[#allocation3 + $0x28] sm:$0xff]
    %v63 = vld [vmem:[#allocation3 + $0x30] sm:$0xff]
    %v64 = vld [vmem:[#allocation3 + $0x38] sm:$0xff]
    %v65 = vld [vmem:[#allocation3 + $0x40] sm:$0xff]
    %v66 = vld [vmem:[#allocation3 + $0x48] sm:$0xff]
    %v67 = vld [vmem:[#allocation3 + $0x50] sm:$0xff]
    %v68 = vld [vmem:[#allocation3 + $0x58] sm:$0xff]
    %v69 = vld [vmem:[#allocation3 + $0x60] sm:$0xff]
    %v70 = vld [vmem:[#allocation3 + $0x68] sm:$0xff]
    %v71 = vld [vmem:[#allocation3 + $0x70] sm:$0xff]
    %v72 = vld [vmem:[#allocation3 + $0x78] sm:$0xff]
    %v73 = vld [vmem:[%s2] sm:$0x1]
    %v75 = vlaneseq
    %v76 = vshrl.u32 %v75, 7
    %v77 = vsub.s32 0, %v76
    %v78 = vrot.slane %v73, %v77
    %80 = vmatprep.subr.mxu0 0.0
    %81 = vmatpush1.msra.mxu0 %v57
    %82 = vmatprep.subr.mxu0 0.0
    %83 = vmatpush1.msra.mxu0 %v58
    %84 = vmatprep.subr.mxu0 0.0
    %85 = vmatpush1.msra.mxu0 %v59
    %86 = vmatprep.subr.mxu0 0.0
    %87 = vmatpush1.msra.mxu0 %v60
    %88 = vmatprep.subr.mxu0 0.0
    %89 = vmatpush1.msra.mxu0 %v61
    %90 = vmatprep.subr.mxu0 0.0
    %91 = vmatpush1.msra.mxu0 %v62
    %92 = vmatprep.subr.mxu0 0.0
    %93 = vmatpush1.msra.mxu0 %v63
    %94 = vmatprep.subr.mxu0 0.0
    %95 = vmatpush1.msra.mxu0 %v64
    %96 = vmatprep.subr.mxu0 0.0
    %97 = vmatpush1.msra.mxu0 %v65
    %98 = vmatprep.subr.mxu0 0.0
    %99 = vmatpush1.msra.mxu0 %v66
    %100 = vmatprep.subr.mxu0 0.0
    %101 = vmatpush1.msra.mxu0 %v67
    %102 = vmatprep.subr.mxu0 0.0
    %103 = vmatpush1.msra.mxu0 %v68
    %104 = vmatprep.subr.mxu0 0.0
    %105 = vmatpush1.msra.mxu0 %v69
    %106 = vmatprep.subr.mxu0 0.0
    %107 = vmatpush1.msra.mxu0 %v70
    %108 = vmatprep.subr.mxu0 0.0
    %109 = vmatpush1.msra.mxu0 %v71
    %110 = vmatprep.subr.mxu0 0.0
    %111 = vmatpush1.msra.mxu0 %v72
    %112 = vmatprep.subr.mxu0 0.0
    %113 = vmatpush1.msra.mxu0 0.0
    %114 = vmatprep.subr.mxu0 0.0
    %115 = vmatpush1.msra.mxu0 0.0
    %116 = vmatprep.subr.mxu0 0.0
    %117 = vmatpush1.msra.mxu0 0.0
    %118 = vmatprep.subr.mxu0 0.0
    %119 = vmatpush1.msra.mxu0 0.0
    %120 = vmatprep.subr.mxu0 0.0
    %121 = vmatpush1.msra.mxu0 0.0
    %122 = vmatprep.subr.mxu0 0.0
    %123 = vmatpush1.msra.mxu0 0.0
    %124 = vmatprep.subr.mxu0 0.0
    %125 = vmatpush1.msra.mxu0 0.0
    %126 = vmatprep.subr.mxu0 0.0
    %127 = vmatpush1.msra.mxu0 0.0
    %128 = vmatprep.subr.mxu0 0.0
    %129 = vmatpush1.msra.mxu0 0.0
    %130 = vmatprep.subr.mxu0 0.0
    %131 = vmatpush1.msra.mxu0 0.0
    %132 = vmatprep.subr.mxu0 0.0
    %133 = vmatpush1.msra.mxu0 0.0
    %134 = vmatprep.subr.mxu0 0.0
    %135 = vmatpush1.msra.mxu0 0.0
    %136 = vmatprep.subr.mxu0 0.0
    %137 = vmatpush1.msra.mxu0 0.0
    %138 = vmatprep.subr.mxu0 0.0
    %139 = vmatpush1.msra.mxu0 0.0
    %140 = vmatprep.subr.mxu0 0.0
    %141 = vmatpush1.msra.mxu0 0.0
    %142 = vmatprep.subr.mxu0 0.0
    %143 = vmatpush1.msra.mxu0 0.0
    %144 = vmatprep.mubr.f32.mxu0 0.0
    %145 = vmatmul.mubr.f32.gmra.mrb[0].mxu0 %v55
    %v146 = vpop.f32.mrb[0].mxu0
    %v147 = vadd.f32 %v78, %v146
    %v148 = vpop.f32.mrb[0].mxu0
    %149 = vmatprep.mubr.f32.mxu0 0.0
    %150 = vmatmul.mubr.f32.gmra.mrb[0].mxu0 %v56
    %v151 = vpop.f32.mrb[0].mxu0
    %v152 = vadd.f32 %v78, %v151
    %v153 = vpop.f32.mrb[0].mxu0
    %154 = vdwg.mxu0
    %v155 = vmul.f32 %v147, 0.5
    %v156 = vmul.f32 %v152, 0.5
    %v157 = vmul.f32 %v147, 0.70710677
    %v158 = vmul.f32 %v152, 0.70710677
    %v159 = verf.f32.pop %v157
    %v160 = verf.f32.pop %v158
    %v161 = vadd.f32 %v159, 1.0
    %v162 = vadd.f32 %v160, 1.0
    %v163 = vmul.f32 %v155, %v161
    %v164 = vmul.f32 %v156, %v162
    %v165 = vld [vmem:[#allocation2] sm:$0xff]
    %v166 = vld [vmem:[#allocation2 + $0x8] sm:$0xff]
    %v167 = vld [vmem:[#allocation6] sm:$0xff]
    %v168 = vld [vmem:[#allocation6 + $0x8] sm:$0xff]
    %v169 = vld [vmem:[#allocation6 + $0x10] sm:$0xff]
    %v170 = vld [vmem:[#allocation6 + $0x18] sm:$0xff]
    %v171 = vld [vmem:[#allocation6 + $0x20] sm:$0xff]
    %v172 = vld [vmem:[#allocation6 + $0x28] sm:$0xff]
    %v173 = vld [vmem:[#allocation6 + $0x30] sm:$0xff]
    %v174 = vld [vmem:[#allocation6 + $0x38] sm:$0xff]
    %v175 = vld [vmem:[#allocation6 + $0x40] sm:$0xff]
    %v176 = vld [vmem:[#allocation6 + $0x48] sm:$0xff]
    %v177 = vld [vmem:[#allocation6 + $0x50] sm:$0xff]
    %v178 = vld [vmem:[#allocation6 + $0x58] sm:$0xff]
    %v179 = vld [vmem:[#allocation6 + $0x60] sm:$0xff]
    %v180 = vld [vmem:[#allocation6 + $0x68] sm:$0xff]
    %v181 = vld [vmem:[#allocation6 + $0x70] sm:$0xff]
    %v182 = vld [vmem:[#allocation6 + $0x78] sm:$0xff]
    %183 = vmatprep.subr.mxu0 0.0
    %184 = vmatpush1.msra.mxu0 %v167
    %185 = vmatprep.subr.mxu0 0.0
    %186 = vmatpush1.msra.mxu0 %v168
    %187 = vmatprep.subr.mxu0 0.0
    %188 = vmatpush1.msra.mxu0 %v169
    %189 = vmatprep.subr.mxu0 0.0
    %190 = vmatpush1.msra.mxu0 %v170
    %191 = vmatprep.subr.mxu0 0.0
    %192 = vmatpush1.msra.mxu0 %v171
    %193 = vmatprep.subr.mxu0 0.0
    %194 = vmatpush1.msra.mxu0 %v172
    %195 = vmatprep.subr.mxu0 0.0
    %196 = vmatpush1.msra.mxu0 %v173
    %197 = vmatprep.subr.mxu0 0.0
    %198 = vmatpush1.msra.mxu0 %v174
    %199 = vmatprep.subr.mxu0 0.0
    %200 = vmatpush1.msra.mxu0 %v175
    %201 = vmatprep.subr.mxu0 0.0
    %202 = vmatpush1.msra.mxu0 %v176
    %203 = vmatprep.subr.mxu0 0.0
    %204 = vmatpush1.msra.mxu0 %v177
    %205 = vmatprep.subr.mxu0 0.0
    %206 = vmatpush1.msra.mxu0 %v178
    %207 = vmatprep.subr.mxu0 0.0
    %208 = vmatpush1.msra.mxu0 %v179
    %209 = vmatprep.subr.mxu0 0.0
    %210 = vmatpush1.msra.mxu0 %v180
    %211 = vmatprep.subr.mxu0 0.0
    %212 = vmatpush1.msra.mxu0 %v181
    %213 = vmatprep.subr.mxu0 0.0
    %214 = vmatpush1.msra.mxu0 %v182
    %215 = vmatprep.subr.mxu0 0.0
    %216 = vmatpush1.msra.mxu0 0.0
    %217 = vmatprep.subr.mxu0 0.0
    %218 = vmatpush1.msra.mxu0 0.0
    %219 = vmatprep.subr.mxu0 0.0
    %220 = vmatpush1.msra.mxu0 0.0
    %221 = vmatprep.subr.mxu0 0.0
    %222 = vmatpush1.msra.mxu0 0.0
    %223 = vmatprep.subr.mxu0 0.0
    %224 = vmatpush1.msra.mxu0 0.0
    %225 = vmatprep.subr.mxu0 0.0
    %226 = vmatpush1.msra.mxu0 0.0
    %227 = vmatprep.subr.mxu0 0.0
    %228 = vmatpush1.msra.mxu0 0.0
    %229 = vmatprep.subr.mxu0 0.0
    %230 = vmatpush1.msra.mxu0 0.0
    %231 = vmatprep.subr.mxu0 0.0
    %232 = vmatpush1.msra.mxu0 0.0
    %233 = vmatprep.subr.mxu0 0.0
    %234 = vmatpush1.msra.mxu0 0.0
    %235 = vmatprep.subr.mxu0 0.0
    %236 = vmatpush1.msra.mxu0 0.0
    %237 = vmatprep.subr.mxu0 0.0
    %238 = vmatpush1.msra.mxu0 0.0
    %239 = vmatprep.subr.mxu0 0.0
    %240 = vmatpush1.msra.mxu0 0.0
    %241 = vmatprep.subr.mxu0 0.0
    %242 = vmatpush1.msra.mxu0 0.0
    %243 = vmatprep.subr.mxu0 0.0
    %244 = vmatpush1.msra.mxu0 0.0
    %245 = vmatprep.subr.mxu0 0.0
    %246 = vmatpush1.msra.mxu0 0.0
    %247 = vmatprep.mubr.f32.mxu0 0.0
    %248 = vmatmul.mubr.f32.gmra.mrb[0].mxu0 %v163
    %v249 = vpop.f32.mrb[0].mxu0
    %v250 = vadd.f32 0.0, %v249
    %v251 = vpop.f32.mrb[0].mxu0
    %252 = vmatprep.mubr.f32.mxu0 0.0
    %253 = vmatmul.mubr.f32.gmra.mrb[0].mxu0 %v164
    %v254 = vpop.f32.mrb[0].mxu0
    %v255 = vadd.f32 0.0, %v254
    %v256 = vpop.f32.mrb[0].mxu0
    %257 = vdwg.mxu0
    %v258 = vadd.f32 %v165, %v250
    %v259 = vadd.f32 %v166, %v255
    %260 = vst [vmem:[#allocation2] sm:$0xff] %v258
    %261 = vst [vmem:[#allocation2 + $0x8] sm:$0xff] %v259
    // Predicated region
    $region34: #{_ffn_call.1} parent=1 // pred_check
      %p262 = pneg %p49
    $region35: #{_ffn_call.1} parent=1 // pred_check_branch
      %264 = sbr.rel (%p262) target = $region37
    $region36: #{_ffn_call.1} parent=1 // pred_region
      %v265 = vld [vmem:[#allocation2] sm:$0xff]
      %v266 = vld [vmem:[#allocation2 + $0x8] sm:$0xff]
      %v267 = vld [vmem:[%s4] sm:$0x1]
      %v269 = vlaneseq
      %v270 = vshrl.u32 %v269, 7
      %v271 = vsub.s32 0, %v270
      %v272 = vrot.slane %v267, %v271
      %v274 = vadd.f32 %v265, %v272
      %v275 = vadd.f32 %v266, %v272
      %v276 = vmul.f32 %v274, 0.5
      %v277 = vmul.f32 %v275, 0.5
      %v278 = vmul.f32 %v274, 0.70710677
      %v279 = vmul.f32 %v275, 0.70710677
      %v280 = verf.f32.pop %v278
      %v281 = verf.f32.pop %v279
      %v282 = vadd.f32 %v280, 1.0
      %v283 = vadd.f32 %v281, 1.0
      %v284 = vmul.f32 %v276, %v282
      %v285 = vmul.f32 %v277, %v283
      %286 = vst [vmem:[#allocation8] sm:$0xff] %v284
      %287 = vst [vmem:[#allocation8 + $0x8] sm:$0xff] %v285
    $region37: #{_ffn_call.1} parent=1 // pred_fallthru
      _
    // Predicated region
    $region38: #{_ffn_call.1} parent=1 // pred_check
      _
    $region39: #{_ffn_call.1} parent=1 // pred_check_branch
      %289 = sbr.rel (0) target = $region41
    $region40: #{_ffn_call.1} parent=1 // pred_region
      %s291 = ssub.s32 256, 256
      %292 = vsyncadd [#allocation5], %s291
      %s293 = sshll.u32 [#allocation8], 4
      %s294 = int_to_ptr.vmem [resolvable:$true] %s293
      %299 = dma.vmem_to_hbm [thread:$0]  %s294, 256, %s5, [#allocation5], 128, 128, 8
    $region41: #{_ffn_call.1} parent=1 // pred_fallthru
      _
    // Predicated region
    $region42: #{_ffn_call.1} parent=1 // pred_check
      _
    $region43: #{_ffn_call.1} parent=1 // pred_check_branch
      %301 = sbr.rel (0) target = $region45
    $region44: #{_ffn_call.1} parent=1 // pred_region
      %302 = dma.done [#allocation5], 256
    $region45: #{_ffn_call.1} parent=1 // pred_fallthru
      _
    %303 = vsyncpa [#allocation4], 1
    %304 = vsyncpa [#allocation7], 1
    %305 = vsyncpa [#allocation5], 1

</llo_original>
